<compile_context>
chip_gen: v5e
topology: v5e:2x2
jax: 0.10.0
libtpu: 0.0.40
codegen_flags: <defaults>
</compile_context>

<pallas_src>
import functools

import jax
import jax.numpy as jnp
from jax.experimental import pallas as pl
from jax.experimental.pallas import tpu as pltpu

LANES = 128   # lane width of a vreg
SUB = 32      # sublane rows per inner compute step (multiple of 8)


def _focal_loss_kernel(x_ref, t_ref, out_ref, acc_ref, *,
                       gamma, hw, s_tile, blocks_per_chunk, need_mask):
    """Grid step (n, p, j): a (C, s_tile, 128) slab of batch-n logits plus the
    matching (s_tile, 128) targets.  Accumulates focal * log p_target into a
    dense (8, 128) VMEM accumulator; on the last j step of the chunk writes
    the negated partial sum to out_ref (1, 1)."""
    p = pl.program_id(1)
    j = pl.program_id(2)

    @pl.when(j == 0)
    def _():
        acc_ref[...] = jnp.zeros_like(acc_ref)

    def process(row0, rows):
        # `rows` is a static Python int; `row0` may be a traced loop index.
        x = x_ref[:, pl.ds(row0, rows), :].astype(jnp.float32)    # (C, rows, 128)
        t = t_ref[pl.ds(row0, rows), :].astype(jnp.int32)         # (rows, 128)

        # Numerically stable log-softmax over the channel (slab) axis — the
        # axis-0 reductions are elementwise VPU ops across the C dense slabs.
        m = jnp.max(x, axis=0)                                    # (rows, 128)
        z = x - m[None]                                           # (C, rows, 128)
        lse = jnp.log(jnp.sum(jnp.exp(z), axis=0))                # (rows, 128)

        # One-hot gather of the target-class shifted logit.
        cidx = jax.lax.broadcasted_iota(jnp.int32, x.shape, 0)    # (C, rows, 128)
        z_t = jnp.sum(jnp.where(cidx == t[None], z, 0.0), axis=0)  # (rows, 128)

        logp_t = z_t - lse                                        # log p_target
        p_t = jnp.exp(logp_t)                                     # EUP
        one_m = 1.0 - p_t
        if float(gamma) == 2.0:
            w = one_m * one_m                     # static square: pure VPU
        elif float(gamma) == int(gamma) and gamma >= 0:
            w = one_m ** int(gamma)               # small integer power
        else:
            w = one_m ** gamma                    # general fallback
        focal = w * logp_t                                        # (rows, 128)

        if need_mask:
            # Select-mask padded lanes / out-of-range rows of ragged blocks.
            g0 = (p * blocks_per_chunk + j) * s_tile + row0
            r_iota = jax.lax.broadcasted_iota(jnp.int32, focal.shape, 0)
            l_iota = jax.lax.broadcasted_iota(jnp.int32, focal.shape, 1)
            elem = (g0 + r_iota) * LANES + l_iota
            focal = jnp.where(elem < hw, focal, 0.0)

        # Fold into the dense (8, 128) accumulator (elementwise vreg adds).
        if rows % 8 == 0:
            acc_ref[...] += focal.reshape(rows // 8, 8, LANES).sum(axis=0)
        else:
            acc_ref[0:1, :] = acc_ref[0:1, :] + jnp.sum(
                focal, axis=0, keepdims=True)

    n_full = s_tile // SUB
    rem = s_tile % SUB
    if n_full > 0:
        def body(i, carry):
            process(pl.multiple_of(i * SUB, SUB), SUB)
            return carry
        jax.lax.fori_loop(0, n_full, body, 0,
                          unroll=True if n_full <= 8 else 4)
    if rem > 0:
        process(n_full * SUB, rem)

    @pl.when(j == pl.num_programs(2) - 1)
    def _():
        # NLLLoss negates; emit the per-(batch, chunk) un-normalized sum.
        col = jnp.sum(acc_ref[...], axis=0, keepdims=True)        # (1, 128)
        out_ref[...] = -jnp.sum(col, axis=1, keepdims=True)       # (1, 1)


def focal_loss_2d(outputs, targets, *, gamma=2.0,
                  target_block_bytes=4 * 1024 * 1024, spatial_chunks=None):
    """outputs: (N, C, H, W) float logits (streamed in their native dtype);
    targets: (N, H, W) integer class ids.  Returns the scalar focal loss."""
    # TODO(synk): per-class NLLLoss `weight` not implemented (module default is None).
    N, C, H, W = outputs.shape
    HW = H * W
    S = pl.cdiv(HW, LANES)          # 128-lane rows after lane padding
    HW_pad = S * LANES

    # Free reshape when HW is lane-aligned; otherwise pad once (zero padding
    # stays finite; padded positions are select-masked inside the kernel).
    x = outputs.reshape(N, C, HW)
    t = targets.reshape(N, HW)
    if HW_pad != HW:
        x = jnp.pad(x, ((0, 0), (0, 0), (0, HW_pad - HW)))
        t = jnp.pad(t, ((0, 0), (0, HW_pad - HW)))
    x = x.reshape(N, C, S, LANES)   # native dtype — upcast happens in-kernel
    t = t.reshape(N, S, LANES)      # native integer dtype

    # Block size: ~target_block_bytes of logits per grid step (a multiple of
    # the in-kernel SUB tile), or the whole spatial extent when smaller.
    bytes_per_row = C * LANES * jnp.dtype(outputs.dtype).itemsize
    rows_budget = max(SUB, (target_block_bytes // bytes_per_row) // SUB * SUB)
    s_tile = S if S <= rows_budget else rows_budget
    num_blocks = pl.cdiv(S, s_tile)

    # Optional second parallel axis (lets v7x's 2 TensorCores split the work
    # when N == 1); a no-op on single-TC v5e/v6e.
    if spatial_chunks is None:
        P = 2 if (N == 1 and num_blocks >= 2 and num_blocks % 2 == 0) else 1
    else:
        P = spatial_chunks if (spatial_chunks >= 1
                               and num_blocks % spatial_chunks == 0) else 1
    J = num_blocks // P

    need_mask = (HW_pad != HW) or (S % s_tile != 0)

    kernel = functools.partial(
        _focal_loss_kernel, gamma=gamma, hw=HW, s_tile=s_tile,
        blocks_per_chunk=J, need_mask=need_mask)

    partials = pl.pallas_call(
        kernel,
        out_shape=jax.ShapeDtypeStruct((N, P, 1, 1), jnp.float32),
        grid_spec=pltpu.PrefetchScalarGridSpec(
            num_scalar_prefetch=0,
            grid=(N, P, J),
            in_specs=[
                pl.BlockSpec((None, C, s_tile, LANES),
                             lambda n, p, j: (n, 0, p * J + j, 0)),
                pl.BlockSpec((None, s_tile, LANES),
                             lambda n, p, j: (n, p * J + j, 0)),
            ],
            out_specs=pl.BlockSpec((None, None, 1, 1),
                                   lambda n, p, j: (n, p, 0, 0)),
            scratch_shapes=[pltpu.VMEM((8, LANES), jnp.float32)],
        ),
        compiler_params=pltpu.CompilerParams(
            dimension_semantics=("parallel", "parallel", "arbitrary"),
            # ~10-12 MiB of double-buffered blocks; safe on v5e/v6e/v7x.
            vmem_limit_bytes=32 * 1024 * 1024,
        ),
    )(x, t)

    # NLLLoss(weight=None, reduction='mean') divides by the element count.
    return jnp.sum(partials) / jnp.float32(N * HW)


def _reference(outputs, targets, gamma=2.0):
    """Pure-JAX reference mirroring the PyTorch module exactly."""
    p = jax.nn.softmax(outputs.astype(jnp.float32), axis=1)        # Softmax2d
    modified = ((1.0 - p) ** gamma) * jnp.log(p)                   # (N, C, H, W)
    picked = jnp.take_along_axis(
        modified, targets[:, None].astype(jnp.int32), axis=1)
    return -jnp.mean(picked)


if __name__ == "__main__":
    key = jax.random.PRNGKey(0)

    # Case 1: the module's nominal small shape (lane-aligned, single sub-tile).
    k1, k2, k3, k4, k5, k6 = jax.random.split(key, 6)
    N, C, H, W = 2, 4, 16, 16
    outputs = jax.random.normal(k1, (N, C, H, W), dtype=jnp.float32)
    targets = jax.random.randint(k2, (N, H, W), 0, C, dtype=jnp.int32)
    loss = jax.block_until_ready(focal_loss_2d(outputs, targets, gamma=2.0))
    ref = jax.block_until_ready(_reference(outputs, targets, gamma=2.0))
    assert jnp.allclose(loss, ref, rtol=1e-5, atol=1e-5), (loss, ref)

    # Case 2: exercises the in-kernel fori_loop / reshape-fold path.
    outputs2 = jax.random.normal(k3, (1, 4, 64, 64), dtype=jnp.float32)
    targets2 = jax.random.randint(k4, (1, 64, 64), 0, 4, dtype=jnp.int32)
    loss2 = jax.block_until_ready(focal_loss_2d(outputs2, targets2, gamma=2.0))
    ref2 = jax.block_until_ready(_reference(outputs2, targets2, gamma=2.0))
    assert jnp.allclose(loss2, ref2, rtol=1e-5, atol=1e-5), (loss2, ref2)

    # Case 3: non-lane-aligned HW — exercises the padding + mask path.
    outputs3 = jax.random.normal(k5, (2, 4, 12, 12), dtype=jnp.float32)
    targets3 = jax.random.randint(k6, (2, 12, 12), 0, 4, dtype=jnp.int32)
    loss3 = jax.block_until_ready(focal_loss_2d(outputs3, targets3, gamma=2.0))
    ref3 = jax.block_until_ready(_reference(outputs3, targets3, gamma=2.0))
    assert jnp.allclose(loss3, ref3, rtol=1e-5, atol=1e-5), (loss3, ref3)

    print("KERNEL_OK")
</pallas_src>

<mosaic_0001>
module attributes {stable_mosaic.version = 11 : i64} {
  func.func @_focal_loss_kernel(%arg0: i32, %arg1: i32, %arg2: i32, %arg3: memref<1x4x2x128xf32, #tpu.memory_space<vmem>>, %arg4: memref<1x2x128xi32, #tpu.memory_space<vmem>>, %arg5: memref<1x1x1x1xf32, #tpu.memory_space<vmem>>, %arg6: memref<8x128xf32, #tpu.memory_space<vmem>>) attributes {dimension_semantics = [#tpu.dimension_semantics<parallel>, #tpu.dimension_semantics<parallel>, #tpu.dimension_semantics<arbitrary>], iteration_bounds = array<i64: 2, 1, 1>, scalar_prefetch = 0 : i64, scratch_operands = 1 : i64, tpu.core_type = #tpu.core_type<tc>, window_params = [{transform_indices = @transform_0, window_bounds = array<i64: 1, 4, 2, 128>}, {transform_indices = @transform_1, window_bounds = array<i64: 1, 2, 128>}, {transform_indices = @transform_2, window_bounds = array<i64: 1, 1, 1, 1>}]} {
    %c0_i32 = arith.constant 0 : i32
    %0 = arith.cmpi eq, %arg2, %c0_i32 : i32
    %1 = arith.extui %0 : i1 to i32
    %c0_i32_0 = arith.constant 0 : i32
    %2 = arith.cmpi ne, %1, %c0_i32_0 : i32
    scf.if %2 {
      %cst_18 = arith.constant 0.000000e+00 : f32
      %35 = vector.broadcast %cst_18 : f32 to vector<8x128xf32>
      %c0_19 = arith.constant 0 : index
      %c0_20 = arith.constant 0 : index
      %36 = vector.load %arg6[%c0_19, %c0_20] : memref<8x128xf32, #tpu.memory_space<vmem>>, vector<8x128xf32>
      tpu.vector_store %arg6[%c0_19, %c0_20], %35 {strides = array<i32>} : memref<8x128xf32, #tpu.memory_space<vmem>>, vector<8x128xf32>,
    } else {
    }
    %c0 = arith.constant 0 : index
    %c0_1 = arith.constant 0 : index
    %c0_2 = arith.constant 0 : index
    %c0_3 = arith.constant 0 : index
    %3 = vector.load %arg3[%c0, %c0_1, %c0_2, %c0_3] : memref<1x4x2x128xf32, #tpu.memory_space<vmem>>, vector<1x4x2x128xf32>
    %4 = vector.shape_cast %3 : vector<1x4x2x128xf32> to vector<4x2x128xf32>
    %c0_4 = arith.constant 0 : index
    %c0_5 = arith.constant 0 : index
    %c0_6 = arith.constant 0 : index
    %5 = vector.load %arg4[%c0_4, %c0_5, %c0_6] : memref<1x2x128xi32, #tpu.memory_space<vmem>>, vector<1x2x128xi32>
    %6 = vector.shape_cast %5 : vector<1x2x128xi32> to vector<2x128xi32>
    %cst = arith.constant dense<0xFF800000> : vector<2x128xf32>
    %7 = vector.multi_reduction <maximumf>, %4, %cst [0] : vector<4x2x128xf32> to vector<2x128xf32>
    %8 = vector.shape_cast %7 : vector<2x128xf32> to vector<1x2x128xf32>
    %9 = vector.broadcast %8 : vector<1x2x128xf32> to vector<4x2x128xf32>
    %10 = arith.subf %4, %9 : vector<4x2x128xf32>
    %11 = math.exp %10 : vector<4x2x128xf32>
    %cst_7 = arith.constant dense<0.000000e+00> : vector<2x128xf32>
    %12 = vector.multi_reduction <add>, %11, %cst_7 [0] : vector<4x2x128xf32> to vector<2x128xf32>
    %13 = math.log %12 : vector<2x128xf32>
    %14 = tpu.iota {dimensions = array<i32: 0>} : vector<4x2x128xi32>
    %15 = vector.shape_cast %6 : vector<2x128xi32> to vector<1x2x128xi32>
    %16 = vector.broadcast %15 : vector<1x2x128xi32> to vector<4x2x128xi32>
    %17 = arith.cmpi eq, %14, %16 : vector<4x2x128xi32>
    %cst_8 = arith.constant 0.000000e+00 : f32
    %18 = vector.broadcast %cst_8 : f32 to vector<4x2x128xf32>
    %19 = arith.select %17, %10, %18 : vector<4x2x128xi1>, vector<4x2x128xf32>
    %cst_9 = arith.constant dense<0.000000e+00> : vector<2x128xf32>
    %20 = vector.multi_reduction <add>, %19, %cst_9 [0] : vector<4x2x128xf32> to vector<2x128xf32>
    %21 = arith.subf %20, %13 : vector<2x128xf32>
    %22 = math.exp %21 : vector<2x128xf32>
    %cst_10 = arith.constant 1.000000e+00 : f32
    %23 = vector.broadcast %cst_10 : f32 to vector<2x128xf32>
    %24 = arith.subf %23, %22 : vector<2x128xf32>
    %25 = arith.mulf %24, %24 : vector<2x128xf32>
    %26 = arith.mulf %25, %21 : vector<2x128xf32>
    %c0_11 = arith.constant 0 : index
    %c0_12 = arith.constant 0 : index
    %27 = vector.load %arg6[%c0_11, %c0_12] : memref<8x128xf32, #tpu.memory_space<vmem>>, vector<1x128xf32>
    %cst_13 = arith.constant dense<0.000000e+00> : vector<128xf32>
    %28 = vector.multi_reduction <add>, %26, %cst_13 [0] : vector<2x128xf32> to vector<128xf32>
    %29 = vector.shape_cast %28 : vector<128xf32> to vector<1x128xf32>
    %30 = arith.addf %27, %29 : vector<1x128xf32>
    %c0_14 = arith.constant 0 : index
    %c0_15 = arith.constant 0 : index
    %31 = vector.load %arg6[%c0_14, %c0_15] : memref<8x128xf32, #tpu.memory_space<vmem>>, vector<1x128xf32>
    tpu.vector_store %arg6[%c0_14, %c0_15], %30 {strides = array<i32>} : memref<8x128xf32, #tpu.memory_space<vmem>>, vector<1x128xf32>,
    %c0_i32_16 = arith.constant 0 : i32
    %32 = arith.cmpi eq, %arg2, %c0_i32_16 : i32
    %33 = arith.extui %32 : i1 to i32
    %c0_i32_17 = arith.constant 0 : i32
    %34 = arith.cmpi ne, %33, %c0_i32_17 : i32
    scf.if %34 {
      %c0_18 = arith.constant 0 : index
      %c0_19 = arith.constant 0 : index
      %35 = vector.load %arg6[%c0_18, %c0_19] : memref<8x128xf32, #tpu.memory_space<vmem>>, vector<8x128xf32>
      %cst_20 = arith.constant dense<0.000000e+00> : vector<128xf32>
      %36 = vector.multi_reduction <add>, %35, %cst_20 [0] : vector<8x128xf32> to vector<128xf32>
      %37 = vector.shape_cast %36 : vector<128xf32> to vector<1x128xf32>
      %cst_21 = arith.constant dense<0.000000e+00> : vector<1xf32>
      %38 = vector.multi_reduction <add>, %37, %cst_21 [1] : vector<1x128xf32> to vector<1xf32>
      %39 = vector.shape_cast %38 : vector<1xf32> to vector<1x1xf32>
      %cst_22 = arith.constant 0.000000e+00 : f32
      %40 = vector.broadcast %cst_22 : f32 to vector<1x1xf32>
      %41 = arith.subf %40, %39 : vector<1x1xf32>
      %c0_23 = arith.constant 0 : index
      %c0_24 = arith.constant 0 : index
      %c0_25 = arith.constant 0 : index
      %c0_26 = arith.constant 0 : index
      %42 = vector.load %arg5[%c0_23, %c0_24, %c0_25, %c0_26] : memref<1x1x1x1xf32, #tpu.memory_space<vmem>>, vector<1x1x1x1xf32>
      %43 = vector.shape_cast %42 : vector<1x1x1x1xf32> to vector<1x1xf32>
      %44 = vector.shape_cast %41 : vector<1x1xf32> to vector<1x1x1x1xf32>
      tpu.vector_store %arg5[%c0_23, %c0_24, %c0_25, %c0_26], %44 {strides = array<i32>} : memref<1x1x1x1xf32, #tpu.memory_space<vmem>>, vector<1x1x1x1xf32>,
    } else {
    }
    return
  }
  func.func @transform_0(%arg0: i32, %arg1: i32, %arg2: i32) -> (i32, i32, i32, i32) {
    %c1_i32 = arith.constant 1 : i32
    %0 = arith.muli %arg1, %c1_i32 : i32
    %1 = arith.addi %0, %arg2 : i32
    %c0_i32 = arith.constant 0 : i32
    %c0_i32_0 = arith.constant 0 : i32
    %c0_i32_1 = arith.constant 0 : i32
    return %arg0, %c0_i32, %1, %c0_i32_0 : i32, i32, i32, i32
  }
  func.func @transform_1(%arg0: i32, %arg1: i32, %arg2: i32) -> (i32, i32, i32) {
    %c1_i32 = arith.constant 1 : i32
    %0 = arith.muli %arg1, %c1_i32 : i32
    %1 = arith.addi %0, %arg2 : i32
    %c0_i32 = arith.constant 0 : i32
    %c0_i32_0 = arith.constant 0 : i32
    return %arg0, %1, %c0_i32 : i32, i32, i32
  }
  func.func @transform_2(%arg0: i32, %arg1: i32, %arg2: i32) -> (i32, i32, i32, i32) {
    %c0_i32 = arith.constant 0 : i32
    %c0_i32_0 = arith.constant 0 : i32
    %c0_i32_1 = arith.constant 0 : i32
    return %arg0, %arg1, %c0_i32, %c0_i32_0 : i32, i32, i32, i32
  }
}

</mosaic_0001>

<llo_original>
// kernel: tpu_custom_call.1
$region0: #{tpu_custom_call.1}
  #allocation0 [shape = 'u32[]', space=smem, size = 0x4, offset = 0x4, fixed_abs, tag = 'smem constant byte address 0x4 - core index']
  #allocation1 [shape = 'u32[72,128]{1,0:T(1,128)}', space=vmem, size = 0x9000, scoped, tag = 'internal scratch']
  #allocation2 [shape = 'f32[8,128]{1,0:T(8,128)}', space=vmem, size = 0x1000, scoped, tag = 'scratch operand']
  %s0 = inlined_call_operand.hbm [shape: f32[2,4,2,128], index: 0, kind: input, shape index: {}]
  %s1 = inlined_call_operand.hbm [shape: s32[2,2,128], index: 1, kind: input, shape index: {}]
  %s2 = inlined_call_operand.vmem [shape: f32[2,1,1,1], index: 2, kind: output, shape index: {}]
  %s3 = sld [smem:[#allocation0]]
  $region57: #{tpu_custom_call.1} parent=0
    _
  %s5 = ssub.s32 1, %s3
  %s6 = scalar_select 0, %s5, %s3
  $region1: #{tpu_custom_call.1} parent=0
    #allocation3 [shape = 'u8[8192]{0}', space=vmem, size = 0x2000, scoped, tag = 'input window, operand 0']
    #allocation4 [shape = 's32[2]{0}', space=sflag, size = 0x8, scoped, tag = 'scoped memory for tpu_custom_call.1']
    #allocation5 [shape = 'u8[2048]{0}', space=vmem, size = 0x800, scoped, tag = 'input window, operand 1']
    #allocation6 [shape = 's32[2]{0}', space=sflag, size = 0x8, scoped, tag = 'scoped memory for tpu_custom_call.1']
    %7 = vsyncpa [#allocation4], 0
    %s8 = scalar_lea.sflag [#allocation4], 1
    %9 = vsyncpa %s8, 0
    %10 = vsyncpa [#allocation6], 0
    %s11 = scalar_lea.sflag [#allocation6], 1
    %12 = vsyncpa %s11, 0
    loop: start=0, step=1, limit=4
    $region2: #{tpu_custom_call.1} parent=1 // loop_pre_header
      _
    $region3: #{tpu_custom_call.1} parent=1 // loop_header
      %s14 = sphi 0, %s18
      %p15 = scmp.ge.s32.totalorder %s14, 4
      %s21 = sphi 0, %s40
      %s22 = sphi 0, %s36
      %s23 = sphi 0, %s32
      %s24 = sphi 0, %s21
      %s25 = sphi 0, %s22
      %s26 = sphi 0, %s23
      %s27 = sphi 0, %s24
      %s28 = sphi 0, %s25
      %s29 = sphi 0, %s26
      %s47 = sphi 0, %s49
      %s50 = sphi 0, %s47
      %s51 = sphi 0, %s50
      %s67 = sphi 0, %s51
      %s77 = sphi 0, %s79
      %s80 = sphi 0, %s77
      %s81 = sphi 0, %s80
      %s97 = sphi 0, %s81
      %s105 = sphi 0, %s107
      %s108 = sphi 0, %s105
      %s109 = sphi 0, %s108
      %s125 = sphi 0, %s109
    $region4: #{tpu_custom_call.1} parent=1 // loop_header_branch
      %17 = sbr.rel (%p15) target = $region8
    $region5: #{tpu_custom_call.1} parent=1 // loop_body
      %s19 = ssub.s32 %s14, 1
      %s20 = ssub.s32 %s14, 2
      %s30 = sadd.s32 1, %s23
      %p31 = scmp.ge.s32.totalorder %s30, 1
      %s32 = scalar_select %p31, 0, %s30
      %s33 = sadd.s32 1, %s22
      %s34 = scalar_select %p31, %s33, %s22
      %p35 = scmp.ge.s32.totalorder %s34, 1
      %s36 = scalar_select %p35, 0, %s34
      %s37 = sadd.s32 1, %s21
      %s38 = scalar_select %p35, %s37, %s21
      %p39 = scmp.ge.s32.totalorder %s38, 2
      %s40 = scalar_select %p39, 0, %s38
      %s41 = sadd.s32 %s22, %s23
      %s42 = sadd.s32 %s36, %s32
      %s43 = ssub.s32 %s21, %s40
      %s44 = ssub.s32 %s41, %s42
      %s45 = sor.u32 %s43, %s44
      %p46 = scmp.eq.s32.totalorder %s45, 0
      %s48 = sadd.s32 %s47, 1
      %s49 = scalar_select %p46, %s47, %s48
      %p52 = pneg %p46
      %p53 = scmp.eq.s32.totalorder %s14, 1
      %p54 = por %p52, %p53
      %p55 = scmp.ne.s32.totalorder %s47, %s50
      %p56 = scmp.eq.s32.totalorder %s14, 0
      %p57 = por %p55, %p56
      %p58 = scmp.ne.s32.totalorder %s47, %s50
      %p59 = scmp.eq.s32.totalorder %s19, 1
      %p60 = por %p58, %p59
      %p61 = scmp.ne.s32.totalorder %s50, %s51
      %p62 = scmp.eq.s32.totalorder %s19, 0
      %p63 = por %p61, %p62
      %p64 = scmp.ne.s32.totalorder %s50, %s51
      %p65 = scmp.eq.s32.totalorder %s20, 1
      %p66 = por %p64, %p65
      %p68 = scmp.ne.s32.totalorder %s51, %s67
      %p69 = scmp.eq.s32.totalorder %s20, 0
      %p70 = por %p68, %p69
      %s71 = sadd.s32 %s22, %s23
      %s72 = sadd.s32 %s36, %s32
      %s73 = ssub.s32 %s21, %s40
      %s74 = ssub.s32 %s71, %s72
      %s75 = sor.u32 %s73, %s74
      %p76 = scmp.eq.s32.totalorder %s75, 0
      %s78 = sadd.s32 %s77, 1
      %s79 = scalar_select %p76, %s77, %s78
      %p82 = pneg %p76
      %p83 = scmp.eq.s32.totalorder %s14, 1
      %p84 = por %p82, %p83
      %p85 = scmp.ne.s32.totalorder %s77, %s80
      %p86 = scmp.eq.s32.totalorder %s14, 0
      %p87 = por %p85, %p86
      %p88 = scmp.ne.s32.totalorder %s77, %s80
      %p89 = scmp.eq.s32.totalorder %s19, 1
      %p90 = por %p88, %p89
      %p91 = scmp.ne.s32.totalorder %s80, %s81
      %p92 = scmp.eq.s32.totalorder %s19, 0
      %p93 = por %p91, %p92
      %p94 = scmp.ne.s32.totalorder %s80, %s81
      %p95 = scmp.eq.s32.totalorder %s20, 1
      %p96 = por %p94, %p95
      %p98 = scmp.ne.s32.totalorder %s81, %s97
      %p99 = scmp.eq.s32.totalorder %s20, 0
      %p100 = por %p98, %p99
      %s101 = ssub.s32 %s21, %s40
      %s102 = ssub.s32 %s22, %s36
      %s103 = sor.u32 %s101, %s102
      %p104 = scmp.eq.s32.totalorder %s103, 0
      %s106 = sadd.s32 %s105, 1
      %s107 = scalar_select %p104, %s105, %s106
      %p110 = pneg %p104
      %p111 = scmp.eq.s32.totalorder %s14, 1
      %p112 = por %p110, %p111
      %p113 = scmp.ne.s32.totalorder %s105, %s108
      %p114 = scmp.eq.s32.totalorder %s14, 0
      %p115 = por %p113, %p114
      %p116 = scmp.ne.s32.totalorder %s105, %s108
      %p117 = scmp.eq.s32.totalorder %s19, 1
      %p118 = por %p116, %p117
      %p119 = scmp.ne.s32.totalorder %s108, %s109
      %p120 = scmp.eq.s32.totalorder %s19, 0
      %p121 = por %p119, %p120
      %p122 = scmp.ne.s32.totalorder %s108, %s109
      %p123 = scmp.eq.s32.totalorder %s20, 1
      %p124 = por %p122, %p123
      %p126 = scmp.ne.s32.totalorder %s109, %s125
      %p127 = scmp.eq.s32.totalorder %s20, 0
      %p128 = por %p126, %p127
      %p129 = scmp.le.s32.totalorder 1, %s14
      %p130 = scmp.lt.s32.totalorder %s14, 3
      %p131 = pnand %p129, %p130
      %p132 = pneg %p131
      // Predicated region
      $region9: #{tpu_custom_call.1} parent=5 // pred_check
        _
      $region10: #{tpu_custom_call.1} parent=5 // pred_check_branch
        %134 = sbr.rel (%p131) target = $region12
      $region11: #{tpu_custom_call.1} parent=5 // pred_region
        %s135 = ssub.s32 %s14, 1
      $region12: #{tpu_custom_call.1} parent=5 // pred_fallthru
        _
      %p136 = scmp.lt.s32.totalorder %s14, 2
      // Predicated region
      $region13: #{tpu_custom_call.1} parent=5 // pred_check
        %p137 = pneg %p136
      $region14: #{tpu_custom_call.1} parent=5 // pred_check_branch
        %139 = sbr.rel (%p137) target = $region16
      $region15: #{tpu_custom_call.1} parent=5 // pred_region
        // Predicated region
        $region17: #{tpu_custom_call.1} parent=15 // pred_check
          %p140 = pneg %p57
        $region18: #{tpu_custom_call.1} parent=15 // pred_check_branch
          %142 = sbr.rel (%p140) target = $region20
        $region19: #{tpu_custom_call.1} parent=15 // pred_region
          %s143 = sand.u32 %s47, 1
          %s144 = scalar_lea.sflag [#allocation4], %s143
          %s145 = sand.u32 %s47, 1
          %s146 = smul.addr %s145, 8
          %s147 = scalar_lea.vmem [#allocation3], %s146
          %s148 = sadd.s32 %s22, %s23
          %150 = vsyncadd %s144, 0
          %s151 = smul.addr %s21, 4
          %s152 = sadd.s32 %s148, %s151
          %s153 = smul.addr %s152, 2
          %s154 = scalar_lea.hbm %s0, %s153
          %s155 = sshll.u32 %s154, 4
          %s156 = int_to_ptr.hbm [resolvable:$true] %s155
          %s157 = sshll.u32 %s147, 4
          %s158 = int_to_ptr.vmem [resolvable:$true] %s157
          %163 = dma.hbm_to_vmem [thread:$0]  %s156, 128, %s158, %s144, 32, 32, 2
        $region20: #{tpu_custom_call.1} parent=15 // pred_fallthru
          _
        // Predicated region
        $region21: #{tpu_custom_call.1} parent=15 // pred_check
          %p164 = pneg %p87
        $region22: #{tpu_custom_call.1} parent=15 // pred_check_branch
          %166 = sbr.rel (%p164) target = $region24
        $region23: #{tpu_custom_call.1} parent=15 // pred_region
          %s167 = sand.u32 %s77, 1
          %s168 = scalar_lea.sflag [#allocation6], %s167
          %s169 = sand.u32 %s77, 1
          %s170 = smul.addr %s169, 2
          %s171 = scalar_lea.vmem [#allocation5], %s170
          %s172 = sadd.s32 %s22, %s23
          %174 = vsyncadd %s168, 0
          %s175 = sadd.s32 %s172, %s21
          %s176 = smul.addr %s175, 2
          %s177 = scalar_lea.hbm %s1, %s176
          %s179 = sshll.u32 %s177, 4
          %s180 = int_to_ptr.hbm [resolvable:$true] %s179
          %s181 = sshll.u32 %s171, 4
          %s182 = int_to_ptr.vmem [resolvable:$true] %s181
          %184 = dma.hbm_to_vmem [thread:$0]  %s180, 32, %s182, %s168
        $region24: #{tpu_custom_call.1} parent=15 // pred_fallthru
          _
      $region16: #{tpu_custom_call.1} parent=5 // pred_fallthru
        _
      %p185 = scmp.le.s32.totalorder 1, %s14
      %p186 = scmp.lt.s32.totalorder %s14, 3
      %p187 = pnand %p185, %p186
      %p188 = pneg %p187
      // Predicated region
      $region25: #{tpu_custom_call.1} parent=5 // pred_check
        _
      $region26: #{tpu_custom_call.1} parent=5 // pred_check_branch
        %190 = sbr.rel (%p187) target = $region28
      $region27: #{tpu_custom_call.1} parent=5 // pred_region
        %s191 = ssub.s32 %s14, 1
        %s192 = sand.u32 %s50, 1
        %s193 = scalar_lea.sflag [#allocation4], %s192
        %s194 = sand.u32 %s50, 1
        %s195 = smul.addr %s194, 8
        %s196 = scalar_lea.vmem [#allocation3], %s195
        // Predicated region
        $region29: #{tpu_custom_call.1} parent=27 // pred_check
          %p197 = pneg %p63
        $region30: #{tpu_custom_call.1} parent=27 // pred_check_branch
          %199 = sbr.rel (%p197) target = $region32
        $region31: #{tpu_custom_call.1} parent=27 // pred_region
          %201 = dma.done %s193, 128
        $region32: #{tpu_custom_call.1} parent=27 // pred_fallthru
          _
        %s202 = sand.u32 %s80, 1
        %s203 = scalar_lea.sflag [#allocation6], %s202
        %s204 = sand.u32 %s80, 1
        %s205 = smul.addr %s204, 2
        %s206 = scalar_lea.vmem [#allocation5], %s205
        // Predicated region
        $region33: #{tpu_custom_call.1} parent=27 // pred_check
          %p207 = pneg %p93
        $region34: #{tpu_custom_call.1} parent=27 // pred_check_branch
          %209 = sbr.rel (%p207) target = $region36
        $region35: #{tpu_custom_call.1} parent=27 // pred_region
          %211 = dma.done %s203, 32
        $region36: #{tpu_custom_call.1} parent=27 // pred_fallthru
          _
        %s212 = sand.u32 %s50, 1
        %s213 = scalar_lea.sflag [#allocation4], %s212
        %s214 = sand.u32 %s50, 1
        %s215 = smul.addr %s214, 8
        %s216 = scalar_lea.vmem [#allocation3], %s215
        %p217 = pneg %p63
        %p218 = pneg %p60
        %s219 = sand.u32 %s80, 1
        %s220 = scalar_lea.sflag [#allocation6], %s219
        %s221 = sand.u32 %s80, 1
        %s222 = smul.addr %s221, 2
        %s223 = scalar_lea.vmem [#allocation5], %s222
        %p224 = pneg %p93
        %p225 = pneg %p90
        %p226 = pneg %p121
        %p227 = pneg %p118
        %p228 = scmp.lt.s32.totalorder %s24, 1
        %s229 = scalar_select %p228, %s24, 1
        %p230 = scmp.lt.s32.totalorder %s25, 0
        %s231 = scalar_select %p230, %s25, 0
        %s232 = sadd.s32 %s231, %s229
        %s233 = scalar_lea.vmem %s2, %s232
        %s234 = sadd.s32 %s25, %s26
        %s235 = sadd.s32 %s25, %s26
        %p236 = scmp.lt.s32.totalorder %s24, 1
        %s237 = scalar_select %p236, %s24, 1
        %p238 = scmp.lt.s32.totalorder %s25, 0
        %s239 = scalar_select %p238, %s25, 0
        %s240 = sadd.s32 %s239, %s237
        %s241 = scalar_lea.vmem %s2, %s240
        %p242 = scmp.eq.s32.totalorder %s26, 0
        // Predicated region
        $region37: #{tpu_custom_call.1} parent=27 // pred_check
          %p243 = pneg %p242
        $region38: #{tpu_custom_call.1} parent=27 // pred_check_branch
          %245 = sbr.rel (%p243) target = $region40
        $region39: #{tpu_custom_call.1} parent=27 // pred_region
          %246 = vst [vmem:[#allocation2] sm:$0xff] 0.0
        $region40: #{tpu_custom_call.1} parent=27 // pred_fallthru
          _
        %v247 = vld [vmem:[%s196] sm:$0x3]
        %v248 = vld [vmem:[%s196 + $0x2] sm:$0x3]
        %v249 = vld [vmem:[%s196 + $0x4] sm:$0x3]
        %v250 = vld [vmem:[%s196 + $0x6] sm:$0x3]
        %v251 = vld [vmem:[%s206] sm:$0x3]
        %vm252 = vcmask 1041408
        %v253 = vsel %vm252, %v247, -inf
        %v254 = vsel %vm252, %v248, -inf
        %v255 = vsel %vm252, %v249, -inf
        %v256 = vsel %vm252, %v250, -inf
        %v257 = vmax.f32 %v253, %v254
        %v258 = vmax.f32 %v255, %v256
        %v259 = vmax.f32 %v257, %v258
        %v260 = vsub.f32 %v247, %v259
        %v261 = vsub.f32 %v248, %v259
        %v262 = vsub.f32 %v249, %v259
        %v263 = vsub.f32 %v250, %v259
        %v264 = vmul.f32 %v260, 1.442695
        %v265 = vpow.pop %v264
        %v266 = vmul.f32 %v261, 1.442695
        %v267 = vpow.pop %v266
        %v268 = vmul.f32 %v262, 1.442695
        %v269 = vpow.pop %v268
        %v270 = vmul.f32 %v263, 1.442695
        %v271 = vpow.pop %v270
        %v272 = vsel %vm252, %v265, 0.0
        %v273 = vsel %vm252, %v267, 0.0
        %v274 = vadd.f32 %v272, %v273
        %v275 = vsel %vm252, %v269, 0.0
        %v276 = vadd.f32 %v274, %v275
        %v277 = vsel %vm252, %v271, 0.0
        %v278 = vadd.f32 %v276, %v277
        %v279 = vlog2.pop %v278
        %v280 = vmul.f32 %v279, 0.6931472
        %vm281 = vcmp.eq.s32.totalorder %v251, 0
        %vm282 = vcmp.eq.s32.totalorder %v251, 1
        %vm283 = vcmp.eq.s32.totalorder %v251, 2
        %vm284 = vcmp.eq.s32.totalorder %v251, 3
        %v285 = vsel %vm281, %v260, 0.0
        %v286 = vsel %vm282, %v261, 0.0
        %v287 = vsel %vm283, %v262, 0.0
        %v288 = vsel %vm284, %v263, 0.0
        %v289 = vsel %vm252, %v285, 0.0
        %v290 = vsel %vm252, %v286, 0.0
        %v291 = vadd.f32 %v289, %v290
        %v292 = vsel %vm252, %v287, 0.0
        %v293 = vadd.f32 %v291, %v292
        %v294 = vsel %vm252, %v288, 0.0
        %v295 = vadd.f32 %v293, %v294
        %v296 = vsub.f32 %v295, %v280
        %v297 = vmul.f32 %v296, 1.442695
        %v298 = vpow.pop %v297
        %v299 = vsub.f32 1.0, %v298
        %v300 = vmul.f32 %v299, %v299
        %v301 = vmul.f32 %v300, %v296
        %v302 = vld [vmem:[#allocation2] sm:$0x1]
        %v303 = vsel %vm252, %v301, 0.0
        %v304 = vrot.slane %v303, 4
        %v305 = vadd.f32 %v303, %v304
        %v306 = vrot.slane %v305, 2
        %v307 = vadd.f32 %v305, %v306
        %v308 = vrot.slane %v307, 1
        %v309 = vadd.f32 %v307, %v308
        %v310 = vadd.f32 %v302, %v309
        %311 = vst [vmem:[#allocation2] sm:$0x1] %v310
        // Predicated region
        $region41: #{tpu_custom_call.1} parent=27 // pred_check
          %p312 = pneg %p242
        $region42: #{tpu_custom_call.1} parent=27 // pred_check_branch
          %314 = sbr.rel (%p312) target = $region44
        $region43: #{tpu_custom_call.1} parent=27 // pred_region
          %v315 = vld [vmem:[#allocation2] sm:$0xff]
          %v316 = vrot.slane %v315, 4
          %v317 = vadd.f32 %v315, %v316
          %v318 = vrot.slane %v317, 2
          %v319 = vadd.f32 %v317, %v318
          %v320 = vrot.slane %v319, 1
          %v321 = vadd.f32 %v319, %v320
          %322 = vadd.xlane.f32.xlu0 %v321
          %v323 = vpop.xlane.xlu0 %322
          %v324 = vsub.f32 0.0, %v323
          %vm325 = vcmask 0
          %326 = vst.msk [vmem:[%s241] sm:$0x1] %vm325, %v324
        $region44: #{tpu_custom_call.1} parent=27 // pred_fallthru
          _
        %p327 = scmp.lt.s32.totalorder %s24, 1
        %s328 = scalar_select %p327, %s24, 1
        %p329 = scmp.lt.s32.totalorder %s25, 0
        %s330 = scalar_select %p329, %s25, 0
        %s331 = sadd.s32 %s330, %s328
        %s332 = scalar_lea.vmem %s2, %s331
        // Predicated region
        $region45: #{tpu_custom_call.1} parent=27 // pred_check
          %p333 = pneg %p118
        $region46: #{tpu_custom_call.1} parent=27 // pred_check_branch
          %335 = sbr.rel (%p333) target = $region48
        $region47: #{tpu_custom_call.1} parent=27 // pred_region
          _
        $region48: #{tpu_custom_call.1} parent=27 // pred_fallthru
          _
      $region28: #{tpu_custom_call.1} parent=5 // pred_fallthru
        _
      %p336 = scmp.le.s32.totalorder 2, %s14
      // Predicated region
      $region49: #{tpu_custom_call.1} parent=5 // pred_check
        %p337 = pneg %p336
      $region50: #{tpu_custom_call.1} parent=5 // pred_check_branch
        %339 = sbr.rel (%p337) target = $region52
      $region51: #{tpu_custom_call.1} parent=5 // pred_region
        %s340 = ssub.s32 %s14, 2
        // Predicated region
        $region53: #{tpu_custom_call.1} parent=51 // pred_check
          %p341 = pneg %p124
        $region54: #{tpu_custom_call.1} parent=51 // pred_check_branch
          %343 = sbr.rel (%p341) target = $region56
        $region55: #{tpu_custom_call.1} parent=51 // pred_region
          %p344 = scmp.lt.s32.totalorder %s27, 1
          %s345 = scalar_select %p344, %s27, 1
          %p346 = scmp.lt.s32.totalorder %s28, 0
          %s347 = scalar_select %p346, %s28, 0
          %s348 = sadd.s32 %s347, %s345
          %s349 = scalar_lea.vmem %s2, %s348
        $region56: #{tpu_custom_call.1} parent=51 // pred_fallthru
          _
      $region52: #{tpu_custom_call.1} parent=5 // pred_fallthru
        _
    $region6: #{tpu_custom_call.1} parent=1 // loop_footer
      %s18 = sadd.s32 1, %s14
    $region7: #{tpu_custom_call.1} parent=1 // loop_footer_branch
      %13 = sbr.rel target = $region3
    $region8: #{tpu_custom_call.1} parent=1 // loop_exit
      _
    %350 = vsyncpa [#allocation4], 1
    %s351 = scalar_lea.sflag [#allocation4], 1
    %352 = vsyncpa %s351, 1
    %353 = vsyncpa [#allocation6], 1
    %s354 = scalar_lea.sflag [#allocation6], 1
    %355 = vsyncpa %s354, 1

</llo_original>
